<compile_context>
chip_gen: v6e
topology: v6e:2x2x1
jax: 0.10.0
libtpu: 0.0.40
codegen_flags: <defaults>
</compile_context>

<pallas_src>
import functools

import jax
import jax.numpy as jnp
from jax.experimental import pallas as pl
from jax.experimental.pallas import tpu as pltpu

EPS = 1e-5  # PyTorch BatchNorm1d default eps


# ----------------------------------------------------------------------------- kernel
def deep_mlp_kernel(x_ref,
                    w0_ref, b0_ref,
                    w1_ref, b1_ref,
                    w2_ref, b2_ref,
                    w3_ref, b3_ref,
                    o_ref, *, approx_recip):
    """(Linear -> ReLU) x3 -> Linear -> Sigmoid on one batch tile, feature-major.

    Weights are pre-transposed to (out, in); all intermediates are (n_i, tile_b)
    so the batch lives on the 128-lane axis.  BatchNorm (eval) is already folded
    into the weights/biases and Dropout is identity in eval mode.  Matmul inputs
    use the weight dtype (f32 or bf16); accumulation and all elementwise math
    stay in f32 (v5e-safe).
    """
    cdt = w0_ref.dtype
    # Single in-kernel transpose of the x tile: (tile_b, F) -> (F, tile_b).
    xt = x_ref[...].T.astype(cdt)
    h = jnp.dot(w0_ref[...], xt, preferred_element_type=jnp.float32) + b0_ref[...]
    h = jnp.maximum(h, 0.0)
    h = jnp.dot(w1_ref[...], h.astype(cdt), preferred_element_type=jnp.float32) + b1_ref[...]
    h = jnp.maximum(h, 0.0)
    h = jnp.dot(w2_ref[...], h.astype(cdt), preferred_element_type=jnp.float32) + b2_ref[...]
    h = jnp.maximum(h, 0.0)
    z = jnp.dot(w3_ref[...], h.astype(cdt), preferred_element_type=jnp.float32) + b3_ref[...]
    # Lane-dense (1, tile_b) sigmoid row.  exp -> EUP; reciprocal -> EUP when
    # approx (perf path), exact divide on the strict-f32 checking path.
    o_ref[...] = pl.reciprocal(1.0 + jnp.exp(-z), approx=approx_recip).astype(o_ref.dtype)


# ----------------------------------------------------------------------------- params
def fold_params(params):
    """Fold each eval-mode BatchNorm1d into the next Linear (one-time transform).

    params: [w0,b0,g0,be0,m0,v0, w1,b1,g1,be1,m1,v1, w2,b2,g2,be2,m2,v2, w3,b3]
    returns: [w0,b0, w1',b1', w2',b2', w3',b3']   (weights as (in, out))
    """
    n_hidden = (len(params) - 2) // 6
    folded = [params[0], params[1]]  # first Linear is unchanged
    for i in range(n_hidden):
        _, _, g, be, m, v = params[6 * i: 6 * i + 6]
        a = g * jax.lax.rsqrt(v + EPS)   # (1, n_i)
        c = be - m * a                   # (1, n_i)
        if i + 1 < n_hidden:
            w_next, b_next = params[6 * (i + 1)], params[6 * (i + 1) + 1]
        else:
            w_next, b_next = params[-2], params[-1]
        folded += [a.T * w_next, c @ w_next + b_next]
    return folded


# ----------------------------------------------------------------------------- wrapper
@functools.partial(jax.jit, static_argnames=("tile_b", "use_bf16"))
def deep_mlp_forward(x, folded_params, *, tile_b=4096, use_bf16=False):
    """x: (B, input_size) f32; folded_params: output of fold_params()."""
    B, F = x.shape
    out_size = folded_params[-1].shape[1]

    # Feature-major parameters: weights (out, in), biases (out, 1).  Tiny arrays,
    # so the per-call transpose/cast is negligible.
    wts = [w.T for w in folded_params[0::2]]
    bts = [b.reshape(-1, 1).astype(jnp.float32) for b in folded_params[1::2]]
    if use_bf16:
        # bf16 weights; x stays f32 in HBM and is cast inside the kernel (no
        # extra wrapper-side HBM pass over x).
        wts = [w.astype(jnp.bfloat16) for w in wts]

    # Tile selection: multiple of 128 (lane-dense output blocks), clamped so the
    # double-buffered x tile stays well inside v5e's 16 MiB scoped-VMEM default.
    max_rows = max(128, ((8 << 20) // (2 * F * x.dtype.itemsize)) // 128 * 128)
    tile = min(tile_b, max_rows)
    if B <= tile:
        tile = B                          # single full-extent block, no padding
    else:
        tile = max(128, (tile // 128) * 128)
    num_tiles = pl.cdiv(B, tile)
    padded_b = num_tiles * tile           # padding only on the output allocation

    param_ops = []
    for w, b in zip(wts, bts):
        param_ops += [w, b]

    def resident_spec(arr):  # full array, same block every step -> stays in VMEM
        return pl.BlockSpec(arr.shape, lambda i: (0, 0))

    # x tile DMA is double-buffered by the BlockSpec pipeline; if profiling on
    # v5e ever shows the x DMA exposed, add pipeline_mode=pl.Buffered(3) here.
    in_specs = ([pl.BlockSpec((tile, F), lambda i: (i, 0))]
                + [resident_spec(p) for p in param_ops])
    # Lane-dense output: batch along the 128-lane axis, one (1, tile) row per step.
    out_spec = pl.BlockSpec((1, tile), lambda i: (0, i))

    out = pl.pallas_call(
        functools.partial(deep_mlp_kernel, approx_recip=use_bf16),
        out_shape=jax.ShapeDtypeStruct((1, padded_b), jnp.float32),
        grid=(num_tiles,),
        in_specs=in_specs,
        out_specs=out_spec,
        compiler_params=pltpu.CompilerParams(
            dimension_semantics=("parallel",)),  # 2-TC sharding on v7x
    )(x, *param_ops)
    return out[0, :B].reshape(B, out_size)


# ----------------------------------------------------------------------------- params / reference
def init_params(key, input_size, hidden_sizes=(16, 32, 16), output_size=1):
    """Deterministic synthetic parameters (shapes match the PyTorch module)."""
    sizes = [input_size] + list(hidden_sizes)
    keys = iter(jax.random.split(key, 6 * len(hidden_sizes) + 2))
    params = []
    for i in range(len(hidden_sizes)):
        fan_in, fan_out = sizes[i], sizes[i + 1]
        w = jax.random.normal(next(keys), (fan_in, fan_out), jnp.float32) / jnp.sqrt(
            jnp.float32(fan_in))
        b = 0.1 * jax.random.normal(next(keys), (1, fan_out), jnp.float32)
        gamma = 1.0 + 0.1 * jax.random.normal(next(keys), (1, fan_out), jnp.float32)
        beta = 0.1 * jax.random.normal(next(keys), (1, fan_out), jnp.float32)
        r_mean = 0.05 * jax.random.normal(next(keys), (1, fan_out), jnp.float32)
        r_var = jnp.abs(jax.random.normal(next(keys), (1, fan_out), jnp.float32)) + 0.5
        params += [w, b, gamma, beta, r_mean, r_var]
    fan_in = hidden_sizes[-1]
    w_out = jax.random.normal(next(keys), (fan_in, output_size), jnp.float32) / jnp.sqrt(
        jnp.float32(fan_in))
    b_out = 0.1 * jax.random.normal(next(keys), (1, output_size), jnp.float32)
    params += [w_out, b_out]
    return params


def reference_forward(x, params):
    """Plain-JAX reference with the ORIGINAL (unfolded) eval-mode semantics."""
    h = x.astype(jnp.float32)
    n_hidden = (len(params) - 2) // 6
    for i in range(n_hidden):
        w, b, g, be, m, v = params[6 * i: 6 * i + 6]
        h = jnp.maximum(h @ w + b, 0.0)
        h = (h - m) * jax.lax.rsqrt(v + EPS) * g + be
    w_out, b_out = params[-2], params[-1]
    return 1.0 / (1.0 + jnp.exp(-(h @ w_out + b_out)))


# ----------------------------------------------------------------------------- main
if __name__ == "__main__":
    key = jax.random.PRNGKey(0)
    k_x, k_p, k_x2 = jax.random.split(key, 3)

    INPUT_SIZE = 32
    params = init_params(k_p, INPUT_SIZE, hidden_sizes=(16, 32, 16), output_size=1)
    folded = fold_params(params)

    # 1) Tiny batch, single full-extent tile, strict f32 check vs unfolded reference.
    B1 = 8
    x1 = jax.random.normal(k_x, (B1, INPUT_SIZE), jnp.float32)
    out1 = jax.block_until_ready(deep_mlp_forward(x1, folded))
    ref1 = reference_forward(x1, params)
    assert out1.shape == (B1, 1), out1.shape
    assert jnp.allclose(out1, ref1, atol=1e-4, rtol=1e-4), float(
        jnp.max(jnp.abs(out1 - ref1)))

    # 2) Multi-tile grid with a ragged trailing block (1000 rows -> 4 tiles of 256):
    #    exercises VMEM-resident weights across grid steps, the lane-dense output
    #    path, and the no-pad ragged handling.  Strict f32 check.
    B2 = 1000
    x2 = jax.random.normal(k_x2, (B2, INPUT_SIZE), jnp.float32)
    out2 = jax.block_until_ready(deep_mlp_forward(x2, folded, tile_b=256))
    ref2 = reference_forward(x2, params)
    assert out2.shape == (B2, 1), out2.shape
    assert jnp.allclose(out2, ref2, atol=1e-4, rtol=1e-4), float(
        jnp.max(jnp.abs(out2 - ref2)))

    # 3) bf16 matmul path (bf16 weights, in-kernel x cast, EUP approx reciprocal).
    out3 = jax.block_until_ready(deep_mlp_forward(x2, folded, tile_b=256, use_bf16=True))
    assert out3.shape == (B2, 1), out3.shape
    assert jnp.allclose(out3, ref2, atol=3e-2, rtol=3e-2), float(
        jnp.max(jnp.abs(out3 - ref2)))

    print("KERNEL_OK")
</pallas_src>

<mosaic_0001>
module attributes {stable_mosaic.version = 11 : i64} {
  func.func @deep_mlp_kernel(%arg0: i32, %arg1: memref<8x32xf32, #tpu.memory_space<vmem>>, %arg2: memref<16x32xf32, #tpu.memory_space<vmem>>, %arg3: memref<16x1xf32, #tpu.memory_space<vmem>>, %arg4: memref<32x16xf32, #tpu.memory_space<vmem>>, %arg5: memref<32x1xf32, #tpu.memory_space<vmem>>, %arg6: memref<16x32xf32, #tpu.memory_space<vmem>>, %arg7: memref<16x1xf32, #tpu.memory_space<vmem>>, %arg8: memref<1x16xf32, #tpu.memory_space<vmem>>, %arg9: memref<1x1xf32, #tpu.memory_space<vmem>>, %arg10: memref<1x8xf32, #tpu.memory_space<vmem>>) attributes {dimension_semantics = [#tpu.dimension_semantics<parallel>], iteration_bounds = array<i64: 1>, scalar_prefetch = 0 : i64, scratch_operands = 0 : i64, tpu.core_type = #tpu.core_type<tc>, window_params = [{transform_indices = @transform_0, window_bounds = array<i64: 8, 32>}, {pipeline_mode = #tpu.pipeline_mode<synchronous>, transform_indices = @transform_1, window_bounds = array<i64: 16, 32>}, {pipeline_mode = #tpu.pipeline_mode<synchronous>, transform_indices = @transform_2, window_bounds = array<i64: 16, 1>}, {pipeline_mode = #tpu.pipeline_mode<synchronous>, transform_indices = @transform_3, window_bounds = array<i64: 32, 16>}, {pipeline_mode = #tpu.pipeline_mode<synchronous>, transform_indices = @transform_4, window_bounds = array<i64: 32, 1>}, {pipeline_mode = #tpu.pipeline_mode<synchronous>, transform_indices = @transform_5, window_bounds = array<i64: 16, 32>}, {pipeline_mode = #tpu.pipeline_mode<synchronous>, transform_indices = @transform_6, window_bounds = array<i64: 16, 1>}, {pipeline_mode = #tpu.pipeline_mode<synchronous>, transform_indices = @transform_7, window_bounds = array<i64: 1, 16>}, {pipeline_mode = #tpu.pipeline_mode<synchronous>, transform_indices = @transform_8, window_bounds = array<i64: 1, 1>}, {transform_indices = @transform_9, window_bounds = array<i64: 1, 8>}]} {
    %c0 = arith.constant 0 : index
    %c0_0 = arith.constant 0 : index
    %0 = vector.load %arg1[%c0, %c0_0] : memref<8x32xf32, #tpu.memory_space<vmem>>, vector<8x32xf32>
    %1 = tpu.transpose %0, [1, 0] : vector<8x32xf32> -> vector<32x8xf32>
    %c0_1 = arith.constant 0 : index
    %c0_2 = arith.constant 0 : index
    %2 = vector.load %arg2[%c0_1, %c0_2] : memref<16x32xf32, #tpu.memory_space<vmem>>, vector<16x32xf32>
    %cst = arith.constant dense<0.000000e+00> : vector<16x8xf32>
    %3 = tpu.matmul %2, %1, %cst {dimension_numbers = #tpu.dot_dimension_numbers<[1], [0], [0], [1], [0, 0, 1, 1], [], []>} : vector<16x32xf32>, vector<32x8xf32>, vector<16x8xf32> -> vector<16x8xf32>
    %c0_3 = arith.constant 0 : index
    %c0_4 = arith.constant 0 : index
    %4 = vector.load %arg3[%c0_3, %c0_4] : memref<16x1xf32, #tpu.memory_space<vmem>>, vector<16x1xf32>
    %5 = vector.broadcast %4 : vector<16x1xf32> to vector<16x8xf32>
    %6 = arith.addf %3, %5 : vector<16x8xf32>
    %cst_5 = arith.constant 0.000000e+00 : f32
    %7 = vector.broadcast %cst_5 : f32 to vector<16x8xf32>
    %8 = arith.maximumf %6, %7 : vector<16x8xf32>
    %c0_6 = arith.constant 0 : index
    %c0_7 = arith.constant 0 : index
    %9 = vector.load %arg4[%c0_6, %c0_7] : memref<32x16xf32, #tpu.memory_space<vmem>>, vector<32x16xf32>
    %cst_8 = arith.constant dense<0.000000e+00> : vector<32x8xf32>
    %10 = tpu.matmul %9, %8, %cst_8 {dimension_numbers = #tpu.dot_dimension_numbers<[1], [0], [0], [1], [0, 0, 1, 1], [], []>} : vector<32x16xf32>, vector<16x8xf32>, vector<32x8xf32> -> vector<32x8xf32>
    %c0_9 = arith.constant 0 : index
    %c0_10 = arith.constant 0 : index
    %11 = vector.load %arg5[%c0_9, %c0_10] : memref<32x1xf32, #tpu.memory_space<vmem>>, vector<32x1xf32>
    %12 = vector.broadcast %11 : vector<32x1xf32> to vector<32x8xf32>
    %13 = arith.addf %10, %12 : vector<32x8xf32>
    %cst_11 = arith.constant 0.000000e+00 : f32
    %14 = vector.broadcast %cst_11 : f32 to vector<32x8xf32>
    %15 = arith.maximumf %13, %14 : vector<32x8xf32>
    %c0_12 = arith.constant 0 : index
    %c0_13 = arith.constant 0 : index
    %16 = vector.load %arg6[%c0_12, %c0_13] : memref<16x32xf32, #tpu.memory_space<vmem>>, vector<16x32xf32>
    %cst_14 = arith.constant dense<0.000000e+00> : vector<16x8xf32>
    %17 = tpu.matmul %16, %15, %cst_14 {dimension_numbers = #tpu.dot_dimension_numbers<[1], [0], [0], [1], [0, 0, 1, 1], [], []>} : vector<16x32xf32>, vector<32x8xf32>, vector<16x8xf32> -> vector<16x8xf32>
    %c0_15 = arith.constant 0 : index
    %c0_16 = arith.constant 0 : index
    %18 = vector.load %arg7[%c0_15, %c0_16] : memref<16x1xf32, #tpu.memory_space<vmem>>, vector<16x1xf32>
    %19 = vector.broadcast %18 : vector<16x1xf32> to vector<16x8xf32>
    %20 = arith.addf %17, %19 : vector<16x8xf32>
    %cst_17 = arith.constant 0.000000e+00 : f32
    %21 = vector.broadcast %cst_17 : f32 to vector<16x8xf32>
    %22 = arith.maximumf %20, %21 : vector<16x8xf32>
    %c0_18 = arith.constant 0 : index
    %c0_19 = arith.constant 0 : index
    %23 = vector.load %arg8[%c0_18, %c0_19] : memref<1x16xf32, #tpu.memory_space<vmem>>, vector<1x16xf32>
    %cst_20 = arith.constant dense<0.000000e+00> : vector<1x8xf32>
    %24 = tpu.matmul %23, %22, %cst_20 {dimension_numbers = #tpu.dot_dimension_numbers<[1], [0], [0], [1], [0, 0, 1, 1], [], []>} : vector<1x16xf32>, vector<16x8xf32>, vector<1x8xf32> -> vector<1x8xf32>
    %c0_21 = arith.constant 0 : index
    %c0_22 = arith.constant 0 : index
    %25 = vector.load %arg9[%c0_21, %c0_22] : memref<1x1xf32, #tpu.memory_space<vmem>>, vector<1x1xf32>
    %26 = vector.broadcast %25 : vector<1x1xf32> to vector<1x8xf32>
    %27 = arith.addf %24, %26 : vector<1x8xf32>
    %cst_23 = arith.constant 0.000000e+00 : f32
    %28 = vector.broadcast %cst_23 : f32 to vector<1x8xf32>
    %29 = arith.subf %28, %27 : vector<1x8xf32>
    %30 = math.exp %29 : vector<1x8xf32>
    %cst_24 = arith.constant 1.000000e+00 : f32
    %31 = vector.broadcast %cst_24 : f32 to vector<1x8xf32>
    %32 = arith.addf %31, %30 : vector<1x8xf32>
    %33 = tpu.reciprocal %32 : vector<1x8xf32> -> vector<1x8xf32>
    %c0_25 = arith.constant 0 : index
    %c0_26 = arith.constant 0 : index
    %34 = vector.load %arg10[%c0_25, %c0_26] : memref<1x8xf32, #tpu.memory_space<vmem>>, vector<1x8xf32>
    tpu.vector_store %arg10[%c0_25, %c0_26], %33 {strides = array<i32>} : memref<1x8xf32, #tpu.memory_space<vmem>>, vector<1x8xf32>,
    return
  }
  func.func @transform_0(%arg0: i32) -> (i32, i32) {
    %c0_i32 = arith.constant 0 : i32
    %c0_i32_0 = arith.constant 0 : i32
    return %arg0, %c0_i32 : i32, i32
  }
  func.func @transform_1(%arg0: i32) -> (i32, i32) {
    %c0_i32 = arith.constant 0 : i32
    %c0_i32_0 = arith.constant 0 : i32
    %c0_i32_1 = arith.constant 0 : i32
    return %c0_i32, %c0_i32_0 : i32, i32
  }
  func.func @transform_2(%arg0: i32) -> (i32, i32) {
    %c0_i32 = arith.constant 0 : i32
    %c0_i32_0 = arith.constant 0 : i32
    %c0_i32_1 = arith.constant 0 : i32
    return %c0_i32, %c0_i32_0 : i32, i32
  }
  func.func @transform_3(%arg0: i32) -> (i32, i32) {
    %c0_i32 = arith.constant 0 : i32
    %c0_i32_0 = arith.constant 0 : i32
    %c0_i32_1 = arith.constant 0 : i32
    return %c0_i32, %c0_i32_0 : i32, i32
  }
  func.func @transform_4(%arg0: i32) -> (i32, i32) {
    %c0_i32 = arith.constant 0 : i32
    %c0_i32_0 = arith.constant 0 : i32
    %c0_i32_1 = arith.constant 0 : i32
    return %c0_i32, %c0_i32_0 : i32, i32
  }
  func.func @transform_5(%arg0: i32) -> (i32, i32) {
    %c0_i32 = arith.constant 0 : i32
    %c0_i32_0 = arith.constant 0 : i32
    %c0_i32_1 = arith.constant 0 : i32
    return %c0_i32, %c0_i32_0 : i32, i32
  }
  func.func @transform_6(%arg0: i32) -> (i32, i32) {
    %c0_i32 = arith.constant 0 : i32
    %c0_i32_0 = arith.constant 0 : i32
    %c0_i32_1 = arith.constant 0 : i32
    return %c0_i32, %c0_i32_0 : i32, i32
  }
  func.func @transform_7(%arg0: i32) -> (i32, i32) {
    %c0_i32 = arith.constant 0 : i32
    %c0_i32_0 = arith.constant 0 : i32
    %c0_i32_1 = arith.constant 0 : i32
    return %c0_i32, %c0_i32_0 : i32, i32
  }
  func.func @transform_8(%arg0: i32) -> (i32, i32) {
    %c0_i32 = arith.constant 0 : i32
    %c0_i32_0 = arith.constant 0 : i32
    %c0_i32_1 = arith.constant 0 : i32
    return %c0_i32, %c0_i32_0 : i32, i32
  }
  func.func @transform_9(%arg0: i32) -> (i32, i32) {
    %c0_i32 = arith.constant 0 : i32
    %c0_i32_0 = arith.constant 0 : i32
    return %c0_i32, %arg0 : i32, i32
  }
}

</mosaic_0001>

<llo_original>
// kernel: deep_mlp_forward.1
$region0: #{deep_mlp_forward.1}
  #allocation0 [shape = 'u32[]', space=smem, size = 0x4, offset = 0x4, fixed_abs, tag = 'smem constant byte address 0x4 - core index']
  #allocation1 [shape = 'u32[144,128]{1,0:T(1,128)}', space=vmem, size = 0x12000, scoped, tag = 'internal scratch']
  #allocation2 [shape = 'f32[1,1]{1,0:T(1,128)S(1)}', space=vmem, size = 0x200, scoped, tag = 'scoped memory for deep_mlp_forward.1']
  %s0 = inlined_call_operand.vmem [shape: f32[8,32], index: 0, kind: input, shape index: {}]
  %s1 = inlined_call_operand.vmem [shape: f32[16,32], index: 1, kind: input, shape index: {}]
  %s2 = inlined_call_operand.vmem [shape: f32[16,1], index: 2, kind: input, shape index: {}]
  %s3 = inlined_call_operand.vmem [shape: f32[32,16], index: 3, kind: input, shape index: {}]
  %s4 = inlined_call_operand.vmem [shape: f32[32,1], index: 4, kind: input, shape index: {}]
  %s5 = inlined_call_operand.vmem [shape: f32[16,32], index: 5, kind: input, shape index: {}]
  %s6 = inlined_call_operand.vmem [shape: f32[16,1], index: 6, kind: input, shape index: {}]
  %s7 = inlined_call_operand.vmem [shape: f32[1,16], index: 7, kind: input, shape index: {}]
  %s8 = inlined_call_operand.<no memory space> [shape: f32[1,1], index: 8, kind: input, shape index: {}]
  %s9 = inlined_call_operand.hbm [shape: f32[1,8], index: 9, kind: output, shape index: {}]
  %s10 = sld [smem:[#allocation0]]
  $region46: #{deep_mlp_forward.1} parent=0
    _
  %s12 = ssub.s32 1, %s10
  %s13 = scalar_select 0, %s12, %s10
  %v14 = vstv %s8
  %15 = vst [vmem:[#allocation2] sm:$0x1] %v14
  $region1: #{deep_mlp_forward.1} parent=0
    #allocation3 [shape = 'u8[512]{0}', space=vmem, size = 0x400, scoped, tag = 'output window, operand 0, single buffered']
    #allocation4 [shape = 's32[1]{0}', space=sflag, size = 0x4, scoped, tag = 'scoped memory for deep_mlp_forward.1']
    %16 = vsyncpa [#allocation4], 0
    // Predicated region
    $region2: #{deep_mlp_forward.1} parent=1 // pred_check
      _
    $region3: #{deep_mlp_forward.1} parent=1 // pred_check_branch
      %18 = sbr.rel (0) target = $region5
    $region4: #{deep_mlp_forward.1} parent=1 // pred_region
      _
    $region5: #{deep_mlp_forward.1} parent=1 // pred_fallthru
      _
    // Predicated region
    $region6: #{deep_mlp_forward.1} parent=1 // pred_check
      _
    $region7: #{deep_mlp_forward.1} parent=1 // pred_check_branch
      %20 = sbr.rel (0) target = $region9
    $region8: #{deep_mlp_forward.1} parent=1 // pred_region
      _
    $region9: #{deep_mlp_forward.1} parent=1 // pred_fallthru
      _
    // Predicated region
    $region10: #{deep_mlp_forward.1} parent=1 // pred_check
      _
    $region11: #{deep_mlp_forward.1} parent=1 // pred_check_branch
      %22 = sbr.rel (0) target = $region13
    $region12: #{deep_mlp_forward.1} parent=1 // pred_region
      _
    $region13: #{deep_mlp_forward.1} parent=1 // pred_fallthru
      _
    // Predicated region
    $region14: #{deep_mlp_forward.1} parent=1 // pred_check
      _
    $region15: #{deep_mlp_forward.1} parent=1 // pred_check_branch
      %24 = sbr.rel (0) target = $region17
    $region16: #{deep_mlp_forward.1} parent=1 // pred_region
      _
    $region17: #{deep_mlp_forward.1} parent=1 // pred_fallthru
      _
    // Predicated region
    $region18: #{deep_mlp_forward.1} parent=1 // pred_check
      _
    $region19: #{deep_mlp_forward.1} parent=1 // pred_check_branch
      %26 = sbr.rel (0) target = $region21
    $region20: #{deep_mlp_forward.1} parent=1 // pred_region
      _
    $region21: #{deep_mlp_forward.1} parent=1 // pred_fallthru
      _
    // Predicated region
    $region22: #{deep_mlp_forward.1} parent=1 // pred_check
      _
    $region23: #{deep_mlp_forward.1} parent=1 // pred_check_branch
      %28 = sbr.rel (0) target = $region25
    $region24: #{deep_mlp_forward.1} parent=1 // pred_region
      _
    $region25: #{deep_mlp_forward.1} parent=1 // pred_fallthru
      _
    // Predicated region
    $region26: #{deep_mlp_forward.1} parent=1 // pred_check
      _
    $region27: #{deep_mlp_forward.1} parent=1 // pred_check_branch
      %30 = sbr.rel (0) target = $region29
    $region28: #{deep_mlp_forward.1} parent=1 // pred_region
      _
    $region29: #{deep_mlp_forward.1} parent=1 // pred_fallthru
      _
    // Predicated region
    $region30: #{deep_mlp_forward.1} parent=1 // pred_check
      _
    $region31: #{deep_mlp_forward.1} parent=1 // pred_check_branch
      %32 = sbr.rel (0) target = $region33
    $region32: #{deep_mlp_forward.1} parent=1 // pred_region
      _
    $region33: #{deep_mlp_forward.1} parent=1 // pred_fallthru
      _
    // Predicated region
    $region34: #{deep_mlp_forward.1} parent=1 // pred_check
      _
    $region35: #{deep_mlp_forward.1} parent=1 // pred_check_branch
      %34 = sbr.rel (0) target = $region37
    $region36: #{deep_mlp_forward.1} parent=1 // pred_region
      _
    $region37: #{deep_mlp_forward.1} parent=1 // pred_fallthru
      _
    %v35 = vld [vmem:[%s0] sm:$0xff]
    %v36 = vld [vmem:[%s1] sm:$0xff]
    %v37 = vld [vmem:[%s1 + $0x8] sm:$0xff]
    %v38 = vld [vmem:[%s2] sm:$0xff]
    %v39 = vld [vmem:[%s2 + $0x8] sm:$0xff]
    %41 = vset.pattern.permute.xlu0 0
    %42 = vperm.xlu0 %41, %v38
    %v43 = vpop.permute.xlu0 %42
    %46 = vset.pattern.permute.xlu0 0
    %47 = vperm.xlu0 %46, %v39
    %v48 = vpop.permute.xlu0 %47
    %vm50 = vcmask 261120
    %v52 = vsel %vm50, %v36, 0
    %v55 = vsel %vm50, %v37, 0
    %v58 = vsel %vm50, %v35, 0
    %60 = vmatprep.subr.mxu0 0.0
    %61 = vmatpush1.xpose.msra.mxu0 0.0
    %62 = vmatprep.subr.mxu0 0.0
    %63 = vmatpush1.xpose.msra.mxu0 0.0
    %64 = vmatprep.subr.mxu0 0.0
    %65 = vmatpush1.xpose.msra.mxu0 0.0
    %66 = vmatprep.subr.mxu0 0.0
    %67 = vmatpush1.xpose.msra.mxu0 0.0
    %68 = vmatprep.subr.mxu0 0.0
    %69 = vmatpush1.xpose.msra.mxu0 0.0
    %70 = vmatprep.subr.mxu0 0.0
    %71 = vmatpush1.xpose.msra.mxu0 0.0
    %72 = vmatprep.subr.mxu0 0.0
    %73 = vmatpush1.xpose.msra.mxu0 0.0
    %74 = vmatprep.subr.mxu0 0.0
    %75 = vmatpush1.xpose.msra.mxu0 0.0
    %76 = vmatprep.subr.mxu0 0.0
    %77 = vmatpush1.xpose.msra.mxu0 0.0
    %78 = vmatprep.subr.mxu0 0.0
    %79 = vmatpush1.xpose.msra.mxu0 0.0
    %80 = vmatprep.subr.mxu0 0.0
    %81 = vmatpush1.xpose.msra.mxu0 0.0
    %82 = vmatprep.subr.mxu0 0.0
    %83 = vmatpush1.xpose.msra.mxu0 0.0
    %84 = vmatprep.subr.mxu0 0.0
    %85 = vmatpush1.xpose.msra.mxu0 0.0
    %86 = vmatprep.subr.mxu0 0.0
    %87 = vmatpush1.xpose.msra.mxu0 0.0
    %88 = vmatprep.subr.mxu0 0.0
    %89 = vmatpush1.xpose.msra.mxu0 0.0
    %90 = vmatprep.subr.mxu0 0.0
    %91 = vmatpush1.xpose.msra.mxu0 %v58
    %92 = vmatprep.subr.mxu0 0.0
    %93 = vmatpush2.xpose.msra.mxu0 0.0
    %94 = vmatprep.subr.mxu0 0.0
    %95 = vmatpush2.xpose.msra.mxu0 0.0
    %96 = vmatprep.subr.mxu0 0.0
    %97 = vmatpush2.xpose.msra.mxu0 0.0
    %98 = vmatprep.subr.mxu0 0.0
    %99 = vmatpush2.xpose.msra.mxu0 0.0
    %100 = vmatprep.subr.mxu0 0.0
    %101 = vmatpush2.xpose.msra.mxu0 0.0
    %102 = vmatprep.subr.mxu0 0.0
    %103 = vmatpush2.xpose.msra.mxu0 0.0
    %104 = vmatprep.subr.mxu0 0.0
    %105 = vmatpush2.xpose.msra.mxu0 0.0
    %106 = vmatprep.subr.mxu0 0.0
    %107 = vmatpush2.xpose.msra.mxu0 0.0
    %108 = vmatprep.subr.mxu0 0.0
    %109 = vmatpush2.xpose.msra.mxu0 0.0
    %110 = vmatprep.subr.mxu0 0.0
    %111 = vmatpush2.xpose.msra.mxu0 0.0
    %112 = vmatprep.subr.mxu0 0.0
    %113 = vmatpush2.xpose.msra.mxu0 0.0
    %114 = vmatprep.subr.mxu0 0.0
    %115 = vmatpush2.xpose.msra.mxu0 0.0
    %116 = vmatprep.subr.mxu0 0.0
    %117 = vmatpush2.xpose.msra.mxu0 0.0
    %118 = vmatprep.subr.mxu0 0.0
    %119 = vmatpush2.xpose.msra.mxu0 0.0
    %120 = vmatprep.subr.mxu0 0.0
    %121 = vmatpush2.xpose.msra.mxu0 0.0
    %122 = vmatprep.subr.mxu0 0.0
    %123 = vmatpush2.xpose.msra.mxu0 0.0
    %124 = vmatprep.mubr.f32.mxu0 0.0
    %125 = vmatmul.mubr.f32.gmra.mxu0 %v52
    %v126 = vpop.f32.mrf.mxu0
    %v127 = vadd.f32 %v43, %v126
    %v128 = vpop.f32.mrf.mxu0
    %129 = vmatprep.mubr.f32.mxu0 0.0
    %130 = vmatmul.mubr.f32.gmra.mxu0 %v55
    %v131 = vpop.f32.mrf.mxu0
    %v132 = vadd.f32 %v48, %v131
    %v133 = vpop.f32.mrf.mxu0
    %134 = vdwg.mxu0
    %v135 = vmax.f32 %v127, 0.0
    %v136 = vmax.f32 %v132, 0.0
    %v137 = vld [vmem:[%s3] sm:$0xff]
    %v138 = vld [vmem:[%s3 + $0x8] sm:$0xff]
    %v139 = vld [vmem:[%s3 + $0x10] sm:$0xff]
    %v140 = vld [vmem:[%s3 + $0x18] sm:$0xff]
    %v141 = vld [vmem:[%s4] sm:$0xff]
    %v142 = vld [vmem:[%s4 + $0x8] sm:$0xff]
    %v143 = vld [vmem:[%s4 + $0x10] sm:$0xff]
    %v144 = vld [vmem:[%s4 + $0x18] sm:$0xff]
    %146 = vset.pattern.permute.xlu0 0
    %147 = vperm.xlu0 %146, %v141
    %v148 = vpop.permute.xlu0 %147
    %151 = vset.pattern.permute.xlu0 0
    %152 = vperm.xlu0 %151, %v142
    %v153 = vpop.permute.xlu0 %152
    %156 = vset.pattern.permute.xlu0 0
    %157 = vperm.xlu0 %156, %v143
    %v158 = vpop.permute.xlu0 %157
    %161 = vset.pattern.permute.xlu0 0
    %162 = vperm.xlu0 %161, %v144
    %v163 = vpop.permute.xlu0 %162
    %vm165 = vcmask 130048
    %v167 = vsel %vm165, %v137, 0
    %v170 = vsel %vm165, %v138, 0
    %v173 = vsel %vm165, %v139, 0
    %v176 = vsel %vm165, %v140, 0
    %178 = vmatprep.subr.mxu0 0.0
    %179 = vmatpush1.msra.mxu0 0.0
    %180 = vmatprep.subr.mxu0 0.0
    %181 = vmatpush1.msra.mxu0 0.0
    %182 = vmatprep.subr.mxu0 0.0
    %183 = vmatpush1.msra.mxu0 0.0
    %184 = vmatprep.subr.mxu0 0.0
    %185 = vmatpush1.msra.mxu0 0.0
    %186 = vmatprep.subr.mxu0 0.0
    %187 = vmatpush1.msra.mxu0 0.0
    %188 = vmatprep.subr.mxu0 0.0
    %189 = vmatpush1.msra.mxu0 0.0
    %190 = vmatprep.subr.mxu0 0.0
    %191 = vmatpush1.msra.mxu0 0.0
    %192 = vmatprep.subr.mxu0 0.0
    %193 = vmatpush1.msra.mxu0 0.0
    %194 = vmatprep.subr.mxu0 0.0
    %195 = vmatpush1.msra.mxu0 0.0
    %196 = vmatprep.subr.mxu0 0.0
    %197 = vmatpush1.msra.mxu0 0.0
    %198 = vmatprep.subr.mxu0 0.0
    %199 = vmatpush1.msra.mxu0 0.0
    %200 = vmatprep.subr.mxu0 0.0
    %201 = vmatpush1.msra.mxu0 0.0
    %202 = vmatprep.subr.mxu0 0.0
    %203 = vmatpush1.msra.mxu0 0.0
    %204 = vmatprep.subr.mxu0 0.0
    %205 = vmatpush1.msra.mxu0 0.0
    %206 = vmatprep.subr.mxu0 0.0
    %207 = vmatpush1.msra.mxu0 %v136
    %208 = vmatprep.subr.mxu0 0.0
    %209 = vmatpush1.msra.mxu0 %v135
    %210 = vmatprep.subr.mxu0 0.0
    %211 = vmatpush2.msra.mxu0 0.0
    %212 = vmatprep.subr.mxu0 0.0
    %213 = vmatpush2.msra.mxu0 0.0
    %214 = vmatprep.subr.mxu0 0.0
    %215 = vmatpush2.msra.mxu0 0.0
    %216 = vmatprep.subr.mxu0 0.0
    %217 = vmatpush2.msra.mxu0 0.0
    %218 = vmatprep.subr.mxu0 0.0
    %219 = vmatpush2.msra.mxu0 0.0
    %220 = vmatprep.subr.mxu0 0.0
    %221 = vmatpush2.msra.mxu0 0.0
    %222 = vmatprep.subr.mxu0 0.0
    %223 = vmatpush2.msra.mxu0 0.0
    %224 = vmatprep.subr.mxu0 0.0
    %225 = vmatpush2.msra.mxu0 0.0
    %226 = vmatprep.subr.mxu0 0.0
    %227 = vmatpush2.msra.mxu0 0.0
    %228 = vmatprep.subr.mxu0 0.0
    %229 = vmatpush2.msra.mxu0 0.0
    %230 = vmatprep.subr.mxu0 0.0
    %231 = vmatpush2.msra.mxu0 0.0
    %232 = vmatprep.subr.mxu0 0.0
    %233 = vmatpush2.msra.mxu0 0.0
    %234 = vmatprep.subr.mxu0 0.0
    %235 = vmatpush2.msra.mxu0 0.0
    %236 = vmatprep.subr.mxu0 0.0
    %237 = vmatpush2.msra.mxu0 0.0
    %238 = vmatprep.subr.mxu0 0.0
    %239 = vmatpush2.msra.mxu0 0.0
    %240 = vmatprep.subr.mxu0 0.0
    %241 = vmatpush2.msra.mxu0 0.0
    %242 = vmatprep.mubr.f32.mxu0 0.0
    %243 = vmatmul.mubr.f32.gmra.mxu0 %v167
    %v244 = vpop.f32.mrf.mxu0
    %v245 = vadd.f32 %v148, %v244
    %v246 = vpop.f32.mrf.mxu0
    %247 = vmatprep.mubr.f32.mxu0 0.0
    %248 = vmatmul.mubr.f32.gmra.mxu0 %v170
    %v249 = vpop.f32.mrf.mxu0
    %v250 = vadd.f32 %v153, %v249
    %v251 = vpop.f32.mrf.mxu0
    %252 = vmatprep.mubr.f32.mxu0 0.0
    %253 = vmatmul.mubr.f32.gmra.mxu0 %v173
    %v254 = vpop.f32.mrf.mxu0
    %v255 = vadd.f32 %v158, %v254
    %v256 = vpop.f32.mrf.mxu0
    %257 = vmatprep.mubr.f32.mxu0 0.0
    %258 = vmatmul.mubr.f32.gmra.mxu0 %v176
    %v259 = vpop.f32.mrf.mxu0
    %v260 = vadd.f32 %v163, %v259
    %v261 = vpop.f32.mrf.mxu0
    %262 = vdwg.mxu0
    %v263 = vmax.f32 %v245, 0.0
    %v264 = vmax.f32 %v250, 0.0
    %v265 = vmax.f32 %v255, 0.0
    %v266 = vmax.f32 %v260, 0.0
    %v267 = vld [vmem:[%s5] sm:$0xff]
    %v268 = vld [vmem:[%s5 + $0x8] sm:$0xff]
    %v269 = vld [vmem:[%s6] sm:$0xff]
    %v270 = vld [vmem:[%s6 + $0x8] sm:$0xff]
    %272 = vset.pattern.permute.xlu0 0
    %273 = vperm.xlu0 %272, %v269
    %v274 = vpop.permute.xlu0 %273
    %277 = vset.pattern.permute.xlu0 0
    %278 = vperm.xlu0 %277, %v270
    %v279 = vpop.permute.xlu0 %278
    %v282 = vsel %vm50, %v267, 0
    %v285 = vsel %vm50, %v268, 0
    %287 = vmatprep.subr.mxu0 0.0
    %288 = vmatpush1.msra.mxu0 0.0
    %289 = vmatprep.subr.mxu0 0.0
    %290 = vmatpush1.msra.mxu0 0.0
    %291 = vmatprep.subr.mxu0 0.0
    %292 = vmatpush1.msra.mxu0 0.0
    %293 = vmatprep.subr.mxu0 0.0
    %294 = vmatpush1.msra.mxu0 0.0
    %295 = vmatprep.subr.mxu0 0.0
    %296 = vmatpush1.msra.mxu0 0.0
    %297 = vmatprep.subr.mxu0 0.0
    %298 = vmatpush1.msra.mxu0 0.0
    %299 = vmatprep.subr.mxu0 0.0
    %300 = vmatpush1.msra.mxu0 0.0
    %301 = vmatprep.subr.mxu0 0.0
    %302 = vmatpush1.msra.mxu0 0.0
    %303 = vmatprep.subr.mxu0 0.0
    %304 = vmatpush1.msra.mxu0 0.0
    %305 = vmatprep.subr.mxu0 0.0
    %306 = vmatpush1.msra.mxu0 0.0
    %307 = vmatprep.subr.mxu0 0.0
    %308 = vmatpush1.msra.mxu0 0.0
    %309 = vmatprep.subr.mxu0 0.0
    %310 = vmatpush1.msra.mxu0 0.0
    %311 = vmatprep.subr.mxu0 0.0
    %312 = vmatpush1.msra.mxu0 %v266
    %313 = vmatprep.subr.mxu0 0.0
    %314 = vmatpush1.msra.mxu0 %v265
    %315 = vmatprep.subr.mxu0 0.0
    %316 = vmatpush1.msra.mxu0 %v264
    %317 = vmatprep.subr.mxu0 0.0
    %318 = vmatpush1.msra.mxu0 %v263
    %319 = vmatprep.subr.mxu0 0.0
    %320 = vmatpush2.msra.mxu0 0.0
    %321 = vmatprep.subr.mxu0 0.0
    %322 = vmatpush2.msra.mxu0 0.0
    %323 = vmatprep.subr.mxu0 0.0
    %324 = vmatpush2.msra.mxu0 0.0
    %325 = vmatprep.subr.mxu0 0.0
    %326 = vmatpush2.msra.mxu0 0.0
    %327 = vmatprep.subr.mxu0 0.0
    %328 = vmatpush2.msra.mxu0 0.0
    %329 = vmatprep.subr.mxu0 0.0
    %330 = vmatpush2.msra.mxu0 0.0
    %331 = vmatprep.subr.mxu0 0.0
    %332 = vmatpush2.msra.mxu0 0.0
    %333 = vmatprep.subr.mxu0 0.0
    %334 = vmatpush2.msra.mxu0 0.0
    %335 = vmatprep.subr.mxu0 0.0
    %336 = vmatpush2.msra.mxu0 0.0
    %337 = vmatprep.subr.mxu0 0.0
    %338 = vmatpush2.msra.mxu0 0.0
    %339 = vmatprep.subr.mxu0 0.0
    %340 = vmatpush2.msra.mxu0 0.0
    %341 = vmatprep.subr.mxu0 0.0
    %342 = vmatpush2.msra.mxu0 0.0
    %343 = vmatprep.subr.mxu0 0.0
    %344 = vmatpush2.msra.mxu0 0.0
    %345 = vmatprep.subr.mxu0 0.0
    %346 = vmatpush2.msra.mxu0 0.0
    %347 = vmatprep.subr.mxu0 0.0
    %348 = vmatpush2.msra.mxu0 0.0
    %349 = vmatprep.subr.mxu0 0.0
    %350 = vmatpush2.msra.mxu0 0.0
    %351 = vmatprep.mubr.f32.mxu0 0.0
    %352 = vmatmul.mubr.f32.gmra.mxu0 %v282
    %v353 = vpop.f32.mrf.mxu0
    %v354 = vadd.f32 %v274, %v353
    %v355 = vpop.f32.mrf.mxu0
    %356 = vmatprep.mubr.f32.mxu0 0.0
    %357 = vmatmul.mubr.f32.gmra.mxu0 %v285
    %v358 = vpop.f32.mrf.mxu0
    %v359 = vadd.f32 %v279, %v358
    %v360 = vpop.f32.mrf.mxu0
    %361 = vdwg.mxu0
    %v362 = vmax.f32 %v354, 0.0
    %v363 = vmax.f32 %v359, 0.0
    %v364 = vld [vmem:[%s7] sm:$0x1]
    %v365 = vld [vmem:[#allocation2] sm:$0x1]
    %367 = vset.pattern.permute.xlu0 0
    %368 = vperm.xlu0 %367, %v365
    %v369 = vpop.permute.xlu0 %368
    %v371 = vlaneseq
    %v372 = vshrl.u32 %v371, 7
    %v373 = vsub.s32 0, %v372
    %v374 = vrot.slane %v369, %v373
    %v376 = vsel %vm165, %v364, 0
    %378 = vmatprep.subr.mxu0 0.0
    %379 = vmatpush1.msra.mxu0 0.0
    %380 = vmatprep.subr.mxu0 0.0
    %381 = vmatpush1.msra.mxu0 0.0
    %382 = vmatprep.subr.mxu0 0.0
    %383 = vmatpush1.msra.mxu0 0.0
    %384 = vmatprep.subr.mxu0 0.0
    %385 = vmatpush1.msra.mxu0 0.0
    %386 = vmatprep.subr.mxu0 0.0
    %387 = vmatpush1.msra.mxu0 0.0
    %388 = vmatprep.subr.mxu0 0.0
    %389 = vmatpush1.msra.mxu0 0.0
    %390 = vmatprep.subr.mxu0 0.0
    %391 = vmatpush1.msra.mxu0 0.0
    %392 = vmatprep.subr.mxu0 0.0
    %393 = vmatpush1.msra.mxu0 0.0
    %394 = vmatprep.subr.mxu0 0.0
    %395 = vmatpush1.msra.mxu0 0.0
    %396 = vmatprep.subr.mxu0 0.0
    %397 = vmatpush1.msra.mxu0 0.0
    %398 = vmatprep.subr.mxu0 0.0
    %399 = vmatpush1.msra.mxu0 0.0
    %400 = vmatprep.subr.mxu0 0.0
    %401 = vmatpush1.msra.mxu0 0.0
    %402 = vmatprep.subr.mxu0 0.0
    %403 = vmatpush1.msra.mxu0 0.0
    %404 = vmatprep.subr.mxu0 0.0
    %405 = vmatpush1.msra.mxu0 0.0
    %406 = vmatprep.subr.mxu0 0.0
    %407 = vmatpush1.msra.mxu0 %v363
    %408 = vmatprep.subr.mxu0 0.0
    %409 = vmatpush1.msra.mxu0 %v362
    %410 = vmatprep.subr.mxu0 0.0
    %411 = vmatpush2.msra.mxu0 0.0
    %412 = vmatprep.subr.mxu0 0.0
    %413 = vmatpush2.msra.mxu0 0.0
    %414 = vmatprep.subr.mxu0 0.0
    %415 = vmatpush2.msra.mxu0 0.0
    %416 = vmatprep.subr.mxu0 0.0
    %417 = vmatpush2.msra.mxu0 0.0
    %418 = vmatprep.subr.mxu0 0.0
    %419 = vmatpush2.msra.mxu0 0.0
    %420 = vmatprep.subr.mxu0 0.0
    %421 = vmatpush2.msra.mxu0 0.0
    %422 = vmatprep.subr.mxu0 0.0
    %423 = vmatpush2.msra.mxu0 0.0
    %424 = vmatprep.subr.mxu0 0.0
    %425 = vmatpush2.msra.mxu0 0.0
    %426 = vmatprep.subr.mxu0 0.0
    %427 = vmatpush2.msra.mxu0 0.0
    %428 = vmatprep.subr.mxu0 0.0
    %429 = vmatpush2.msra.mxu0 0.0
    %430 = vmatprep.subr.mxu0 0.0
    %431 = vmatpush2.msra.mxu0 0.0
    %432 = vmatprep.subr.mxu0 0.0
    %433 = vmatpush2.msra.mxu0 0.0
    %434 = vmatprep.subr.mxu0 0.0
    %435 = vmatpush2.msra.mxu0 0.0
    %436 = vmatprep.subr.mxu0 0.0
    %437 = vmatpush2.msra.mxu0 0.0
    %438 = vmatprep.subr.mxu0 0.0
    %439 = vmatpush2.msra.mxu0 0.0
    %440 = vmatprep.subr.mxu0 0.0
    %441 = vmatpush2.msra.mxu0 0.0
    %442 = vmatprep.mubr.f32.mxu0 0.0
    %443 = vmatmul.mubr.f32.gmra.mxu0 %v376
    %v444 = vpop.f32.mrf.mxu0
    %v445 = vadd.f32 %v374, %v444
    %v446 = vpop.f32.mrf.mxu0
    %447 = vdwg.mxu0
    %v448 = vsub.f32 0.0, %v445
    %v449 = vmul.f32 %v448, 1.442695
    %v450 = vpow.pop %v449
    %v451 = vadd.f32 %v450, 1.0
    %v452 = vrcp.pop %v451
    %vm453 = vcmask 57344
    %454 = vst.msk [vmem:[#allocation3] sm:$0x1] %vm453, %v452
    // Predicated region
    $region38: #{deep_mlp_forward.1} parent=1 // pred_check
      _
    $region39: #{deep_mlp_forward.1} parent=1 // pred_check_branch
      %456 = sbr.rel (0) target = $region41
    $region40: #{deep_mlp_forward.1} parent=1 // pred_region
      %s458 = ssub.s32 16, 16
      %459 = vsyncadd [#allocation4], %s458
      %s461 = sshll.u32 [#allocation3], 4
      %s462 = int_to_ptr.vmem [resolvable:$true] %s461
      %464 = dma.vmem_to_hbm [thread:$0]  %s462, 16, %s9, [#allocation4]
    $region41: #{deep_mlp_forward.1} parent=1 // pred_fallthru
      _
    // Predicated region
    $region42: #{deep_mlp_forward.1} parent=1 // pred_check
      _
    $region43: #{deep_mlp_forward.1} parent=1 // pred_check_branch
      %466 = sbr.rel (0) target = $region45
    $region44: #{deep_mlp_forward.1} parent=1 // pred_region
      %467 = dma.done [#allocation4], 16
    $region45: #{deep_mlp_forward.1} parent=1 // pred_fallthru
      _
    %468 = vsyncpa [#allocation4], 1

</llo_original>
